<compile_context>
chip_gen: v5e
topology: v5e:2x2
jax: 0.10.0
libtpu: 0.0.40
codegen_flags: <defaults>
</compile_context>

<pallas_src>
import functools

import jax
import jax.numpy as jnp
import numpy as np
from jax import lax
from jax.experimental import pallas as pl
from jax.experimental.pallas import tpu as pltpu

LANES = 128
MASK_VALUE = -1e30
XW_RESIDENT_BYTES = 6 * 1024 * 1024   # keep resident xw (double-buffered) well under VMEM


def _round_up(x, m):
    return (x + m - 1) // m * m


def _pick_dst_tile(n_p):
    # 256 fills the 256-wide MXUs (v6e/v7x) and halves grid steps; keep >=2 dst tiles
    # so the "parallel" axis can still shard across v7x's two TensorCores.
    if n_p >= 512 and n_p % 256 == 0:
        return 256
    return 128


def _pick_src_tile(n_p):
    # Large src tiles: fewer grid steps, longer MXU K, better DMA efficiency.
    for cand in (2048, 1024, 512, 256, 128):
        if n_p % cand == 0:
            return cand
    return n_p


# ---------------------------------------------------------------------------
# Kernel 1: projection  xw = x @ W  and attention logit slab (all on the MXU)
# ---------------------------------------------------------------------------
def gat_project_kernel(x_ref, w_ref, att_ref, xw_ref, logit_ref):
    x = x_ref[...].astype(jnp.bfloat16)                     # no-op for bf16 inter-layer acts
    xw = jnp.dot(x, w_ref[...], preferred_element_type=jnp.float32)
    xw_bf = xw.astype(jnp.bfloat16)
    xw_ref[...] = xw_bf
    # (tm, cout_p) @ (cout_p, 128) -> lane-dense logits slab: col0=a_dst, col1=a_src
    logit_ref[...] = jnp.dot(xw_bf, att_ref[...], preferred_element_type=jnp.float32)


# ---------------------------------------------------------------------------
# Kernel 2: block-sparse masked-softmax attention + aggregation, fused epilogue
# ---------------------------------------------------------------------------
def gat_attn_kernel(blk_tbl_ref, cnt_ref,                       # scalar-prefetch (SMEM)
                    a_dst_ref, a_src_ref, xw_ref, adj_ref, scale_ref, shift_ref,
                    o_ref, m_sc, l_sc, acc_sc,
                    *, tk, relu, xw_resident):
    i = pl.program_id(0)
    k = pl.program_id(1)

    @pl.when(k == 0)
    def _():
        m_sc[...] = jnp.full_like(m_sc, -jnp.inf)
        l_sc[...] = jnp.zeros_like(l_sc)
        acc_sc[...] = jnp.zeros_like(acc_sc)

    @pl.when(k < cnt_ref[i])                                  # skip padded (repeated) blocks
    def _():
        # scores[r, c] = leaky_relu(a_dst[r] + a_src[c], 0.2), masked by int8 adjacency
        s = a_dst_ref[...] + a_src_ref[...]                   # (tm,1)+(1,tk) -> (tm,tk)
        s = jnp.maximum(s, 0.2 * s)                           # leaky relu, 2 VALU ops
        mask = adj_ref[...] != 0                              # int8 compare, no convert
        s = jnp.where(mask, s, MASK_VALUE)

        m_prev = m_sc[...]
        m_new = jnp.maximum(m_prev, jnp.max(s, axis=-1, keepdims=True))
        alpha = jnp.exp(m_prev - m_new)
        p = jnp.exp(s - m_new)
        p = jnp.where(mask, p, 0.0)                           # robust for all-masked rows
        l_sc[...] = alpha * l_sc[...] + jnp.sum(p, axis=-1, keepdims=True)

        if xw_resident:
            src0 = pl.multiple_of(blk_tbl_ref[i, k] * tk, tk)
            xw_t = xw_ref[pl.ds(src0, tk), :]                 # slice the resident xw
        else:
            xw_t = xw_ref[...]
        acc_sc[...] = alpha * acc_sc[...] + jnp.dot(
            p.astype(jnp.bfloat16), xw_t, preferred_element_type=jnp.float32)
        m_sc[...] = m_new

    @pl.when(k == pl.num_programs(1) - 1)
    def _():
        out = acc_sc[...] * pl.reciprocal(l_sc[...], approx=True)
        out = out * scale_ref[...] + shift_ref[...]           # prefolded bias + BN(eval)
        if relu:
            out = jnp.maximum(out, 0.0)
        o_ref[...] = out.astype(o_ref.dtype)


# ---------------------------------------------------------------------------
# Layer wrapper: projection pallas_call + block-sparse attention pallas_call
# ---------------------------------------------------------------------------
def gat_layer(x, adj, blk_tbl, counts, w, att_cat, scale, shift,
              *, relu, tm, tk, out_dtype):
    n_p, c_in_p = x.shape
    c_out_p = w.shape[1]
    max_nnz = blk_tbl.shape[1]

    xw, logits = pl.pallas_call(
        gat_project_kernel,
        out_shape=(jax.ShapeDtypeStruct((n_p, c_out_p), jnp.bfloat16),
                   jax.ShapeDtypeStruct((n_p, LANES), jnp.float32)),
        grid_spec=pltpu.PrefetchScalarGridSpec(
            num_scalar_prefetch=0,
            grid=(n_p // tm,),
            in_specs=[pl.BlockSpec((tm, c_in_p), lambda i: (i, 0)),
                      pl.BlockSpec((c_in_p, c_out_p), lambda i: (0, 0)),
                      pl.BlockSpec((c_out_p, LANES), lambda i: (0, 0))],
            out_specs=[pl.BlockSpec((tm, c_out_p), lambda i: (i, 0)),
                       pl.BlockSpec((tm, LANES), lambda i: (i, 0))]),
        compiler_params=pltpu.CompilerParams(dimension_semantics=("parallel",)),
    )(x, w, att_cat)

    a_dst = logits[:, 0:1]                      # (n_p, 1)
    a_src_row = logits[:, 1].reshape(1, n_p)    # (1, n_p): lane-major row for the kernel

    xw_resident = n_p * c_out_p * 2 <= XW_RESIDENT_BYTES
    if xw_resident:
        xw_spec = pl.BlockSpec((n_p, c_out_p), lambda i, k, tbl, cnt: (0, 0))
    else:
        xw_spec = pl.BlockSpec((tk, c_out_p), lambda i, k, tbl, cnt: (tbl[i, k], 0))

    kernel = functools.partial(gat_attn_kernel, tk=tk, relu=relu, xw_resident=xw_resident)
    out = pl.pallas_call(
        kernel,
        out_shape=jax.ShapeDtypeStruct((n_p, c_out_p), out_dtype),
        grid_spec=pltpu.PrefetchScalarGridSpec(
            num_scalar_prefetch=2,                     # block table + per-dst-tile counts
            grid=(n_p // tm, max_nnz),
            in_specs=[
                pl.BlockSpec((tm, 1), lambda i, k, tbl, cnt: (i, 0)),          # a_dst col
                pl.BlockSpec((1, tk), lambda i, k, tbl, cnt: (0, tbl[i, k])),  # a_src row
                xw_spec,                                                        # xw (bf16)
                pl.BlockSpec((tm, tk), lambda i, k, tbl, cnt: (i, tbl[i, k])),  # adj int8
                pl.BlockSpec((1, c_out_p), lambda i, k, tbl, cnt: (0, 0)),      # scale
                pl.BlockSpec((1, c_out_p), lambda i, k, tbl, cnt: (0, 0)),      # shift
            ],
            out_specs=pl.BlockSpec((tm, c_out_p), lambda i, k, tbl, cnt: (i, 0)),
            scratch_shapes=[pltpu.VMEM((tm, 1), jnp.float32),        # m
                            pltpu.VMEM((tm, 1), jnp.float32),        # l
                            pltpu.VMEM((tm, c_out_p), jnp.float32)]  # acc
        ),
        compiler_params=pltpu.CompilerParams(
            dimension_semantics=("parallel", "arbitrary"),
            vmem_limit_bytes=32 * 1024 * 1024),
    )(blk_tbl, counts, a_dst, a_src_row, xw, adj, scale, shift)
    return out


# ---------------------------------------------------------------------------
# Parameters, adjacency, block-sparsity preprocessing, forward glue
# ---------------------------------------------------------------------------
def glorot(key, shape):
    fan_in, fan_out = shape[0], shape[-1]
    lim = np.sqrt(6.0 / (fan_in + fan_out))
    return jax.random.uniform(key, shape, jnp.float32, -lim, lim)


def init_gat_params(key, in_channels, hidden_channels, out_channels, num_layers):
    dims = [in_channels] + [hidden_channels] * (num_layers - 1) + [out_channels]
    convs, bns = [], []
    for li in range(num_layers):
        key, k1, k2, k3 = jax.random.split(key, 4)
        c_in, c_out = dims[li], dims[li + 1]
        convs.append(dict(
            w=glorot(k1, (c_in, c_out)),
            att_src=glorot(k2, (1, c_out)),
            att_dst=glorot(k3, (1, c_out)),
            bias=jnp.zeros((1, c_out), jnp.float32),
        ))
        if li < num_layers - 1:
            bns.append(dict(
                gamma=jnp.ones((1, c_out), jnp.float32),
                beta=jnp.zeros((1, c_out), jnp.float32),
                mean=jnp.zeros((1, c_out), jnp.float32),
                var=jnp.ones((1, c_out), jnp.float32),
            ))
    return convs, bns


def dense_adjacency_np(edge_index_np, num_nodes, padded_nodes=None):
    """int8 adjacency: adj[dst, src] = 1 per edge (src -> dst), plus self loops."""
    if padded_nodes is None:
        padded_nodes = num_nodes
    adj = np.zeros((padded_nodes, padded_nodes), np.int8)
    adj[edge_index_np[1], edge_index_np[0]] = 1
    diag = np.arange(padded_nodes)
    adj[diag, diag] = 1
    return adj


def block_sparsity_np(adj_np, tm, tk):
    """Per-dst-tile list of nonzero src-block indices (padded by repeating the last)."""
    n_p = adj_np.shape[0]
    nd, ns = n_p // tm, n_p // tk
    blk_nnz = adj_np.reshape(nd, tm, ns, tk).any(axis=(1, 3))   # (nd, ns) bool
    counts = blk_nnz.sum(axis=1).astype(np.int32)               # >= 1 (self loops)
    max_nnz = int(counts.max())
    tbl = np.zeros((nd, max_nnz), np.int32)
    for i in range(nd):
        idx = np.nonzero(blk_nnz[i])[0]
        tbl[i, :len(idx)] = idx
        if len(idx) < max_nnz:        # repeat last index -> consecutive-equal blocks, DMA elided
            tbl[i, len(idx):] = idx[-1]
    return tbl, counts


def _pad2(a, rows, cols, value=0.0):
    return jnp.pad(a, ((0, rows - a.shape[0]), (0, cols - a.shape[1])),
                   constant_values=value)


def gat_forward(x, edge_index, convs, bns):
    n, c_in = x.shape
    n_p = _round_up(n, LANES)
    tm = _pick_dst_tile(n_p)
    tk = _pick_src_tile(n_p)

    adj_np = dense_adjacency_np(np.asarray(edge_index), n, n_p)
    tbl_np, cnt_np = block_sparsity_np(adj_np, tm, tk)
    adj = jnp.asarray(adj_np)
    blk_tbl = jnp.asarray(tbl_np)
    counts = jnp.asarray(cnt_np)

    h = _pad2(x, n_p, _round_up(c_in, LANES))
    out_c = convs[-1]["w"].shape[1]
    for li, cp in enumerate(convs):
        c_in_l, c_out_l = cp["w"].shape
        cin_p, cout_p = _round_up(c_in_l, LANES), _round_up(c_out_l, LANES)
        is_last = li == len(convs) - 1

        w_p = _pad2(cp["w"], cin_p, cout_p).astype(jnp.bfloat16)
        att_cat = jnp.zeros((cout_p, LANES), jnp.float32)
        att_cat = att_cat.at[:c_out_l, 0].set(cp["att_dst"][0])
        att_cat = att_cat.at[:c_out_l, 1].set(cp["att_src"][0])
        att_cat = att_cat.astype(jnp.bfloat16)

        # Pre-fold bias + BatchNorm1d(eval) into scale/shift (padded lanes -> 0).
        if is_last:
            scale = jnp.ones((1, c_out_l), jnp.float32)
            shift = cp["bias"]
        else:
            bp = bns[li]
            scale = bp["gamma"] * lax.rsqrt(bp["var"] + 1e-5)
            shift = bp["beta"] + (cp["bias"] - bp["mean"]) * scale
        scale_p = _pad2(scale, 1, cout_p)
        shift_p = _pad2(shift, 1, cout_p)

        h = gat_layer(h, adj, blk_tbl, counts, w_p, att_cat, scale_p, shift_p,
                      relu=not is_last, tm=tm, tk=tk,
                      out_dtype=jnp.float32 if is_last else jnp.bfloat16)
        # F.dropout(training=False) is identity
    return h[:n, :out_c]


# ---------------------------------------------------------------------------
# Pure-JAX f32 reference (kernel runs bf16 MXU operands end-to-end -> loose tol)
# ---------------------------------------------------------------------------
def gat_conv_ref(x, w, att_src, att_dst, bias, adj):
    xw = x @ w
    a_src = jnp.sum(xw * att_src, axis=-1, keepdims=True)
    a_dst = jnp.sum(xw * att_dst, axis=-1, keepdims=True)
    s = a_dst + a_src.T
    s = jnp.where(s > 0, s, 0.2 * s)
    s = jnp.where(adj != 0, s, MASK_VALUE)
    attn = jax.nn.softmax(s, axis=-1)
    return attn @ xw + bias


def gat_forward_ref(x, edge_index, convs, bns):
    adj = jnp.asarray(dense_adjacency_np(np.asarray(edge_index), x.shape[0]))
    for li, cp in enumerate(convs[:-1]):
        x = gat_conv_ref(x, cp["w"], cp["att_src"], cp["att_dst"], cp["bias"], adj)
        bp = bns[li]
        x = (x - bp["mean"]) * lax.rsqrt(bp["var"] + 1e-5) * bp["gamma"] + bp["beta"]
        x = jnp.maximum(x, 0.0)
    cp = convs[-1]
    return gat_conv_ref(x, cp["w"], cp["att_src"], cp["att_dst"], cp["bias"], adj)


# ---------------------------------------------------------------------------
if __name__ == "__main__":
    N = 64             # nodes
    E = 256            # edges
    IN_C, HID_C, OUT_C = 16, 32, 8
    NUM_LAYERS = 3

    key = jax.random.PRNGKey(0)
    k_x, k_e, k_p = jax.random.split(key, 3)

    x = jax.random.normal(k_x, (N, IN_C), jnp.float32)
    edge_index = jax.random.randint(k_e, (2, E), 0, N, dtype=jnp.int32)

    convs, bns = init_gat_params(k_p, IN_C, HID_C, OUT_C, NUM_LAYERS)

    out = jax.block_until_ready(gat_forward(x, edge_index, convs, bns))
    assert out.shape == (N, OUT_C)

    ref = jax.block_until_ready(gat_forward_ref(x, edge_index, convs, bns))
    # bf16 projection + bf16 aggregation + bf16 inter-layer activations + approx
    # reciprocal -> compare against the f32 reference loosely.
    np.testing.assert_allclose(np.asarray(out), np.asarray(ref), rtol=6e-2, atol=6e-2)

    print("KERNEL_OK")
</pallas_src>

<mosaic_0001>
module attributes {stable_mosaic.version = 11 : i64} {
  func.func @gat_project_kernel(%arg0: i32, %arg1: memref<128x128xf32, #tpu.memory_space<vmem>>, %arg2: memref<128x128xbf16, #tpu.memory_space<vmem>>, %arg3: memref<128x128xbf16, #tpu.memory_space<vmem>>, %arg4: memref<128x128xbf16, #tpu.memory_space<vmem>>, %arg5: memref<128x128xf32, #tpu.memory_space<vmem>>) attributes {dimension_semantics = [#tpu.dimension_semantics<parallel>], iteration_bounds = array<i64: 1>, scalar_prefetch = 0 : i64, scratch_operands = 0 : i64, tpu.core_type = #tpu.core_type<tc>, window_params = [{transform_indices = @transform_0, window_bounds = array<i64: 128, 128>}, {pipeline_mode = #tpu.pipeline_mode<synchronous>, transform_indices = @transform_1, window_bounds = array<i64: 128, 128>}, {pipeline_mode = #tpu.pipeline_mode<synchronous>, transform_indices = @transform_2, window_bounds = array<i64: 128, 128>}, {transform_indices = @transform_3, window_bounds = array<i64: 128, 128>}, {transform_indices = @transform_4, window_bounds = array<i64: 128, 128>}]} {
    %c0 = arith.constant 0 : index
    %c0_0 = arith.constant 0 : index
    %0 = vector.load %arg1[%c0, %c0_0] : memref<128x128xf32, #tpu.memory_space<vmem>>, vector<128x128xf32>
    %1 = arith.truncf %0 : vector<128x128xf32> to vector<128x128xbf16>
    %c0_1 = arith.constant 0 : index
    %c0_2 = arith.constant 0 : index
    %2 = vector.load %arg2[%c0_1, %c0_2] : memref<128x128xbf16, #tpu.memory_space<vmem>>, vector<128x128xbf16>
    %cst = arith.constant dense<0.000000e+00> : vector<128x128xf32>
    %3 = tpu.matmul %1, %2, %cst {dimension_numbers = #tpu.dot_dimension_numbers<[1], [0], [0], [1], [0, 0, 1, 1], [], []>} : vector<128x128xbf16>, vector<128x128xbf16>, vector<128x128xf32> -> vector<128x128xf32>
    %4 = arith.truncf %3 : vector<128x128xf32> to vector<128x128xbf16>
    %c0_3 = arith.constant 0 : index
    %c0_4 = arith.constant 0 : index
    %5 = vector.load %arg4[%c0_3, %c0_4] : memref<128x128xbf16, #tpu.memory_space<vmem>>, vector<128x128xbf16>
    tpu.vector_store %arg4[%c0_3, %c0_4], %4 {strides = array<i32>} : memref<128x128xbf16, #tpu.memory_space<vmem>>, vector<128x128xbf16>,
    %c0_5 = arith.constant 0 : index
    %c0_6 = arith.constant 0 : index
    %6 = vector.load %arg3[%c0_5, %c0_6] : memref<128x128xbf16, #tpu.memory_space<vmem>>, vector<128x128xbf16>
    %cst_7 = arith.constant dense<0.000000e+00> : vector<128x128xf32>
    %7 = tpu.matmul %4, %6, %cst_7 {dimension_numbers = #tpu.dot_dimension_numbers<[1], [0], [0], [1], [0, 0, 1, 1], [], []>} : vector<128x128xbf16>, vector<128x128xbf16>, vector<128x128xf32> -> vector<128x128xf32>
    %c0_8 = arith.constant 0 : index
    %c0_9 = arith.constant 0 : index
    %8 = vector.load %arg5[%c0_8, %c0_9] : memref<128x128xf32, #tpu.memory_space<vmem>>, vector<128x128xf32>
    tpu.vector_store %arg5[%c0_8, %c0_9], %7 {strides = array<i32>} : memref<128x128xf32, #tpu.memory_space<vmem>>, vector<128x128xf32>,
    return
  }
  func.func @transform_0(%arg0: i32) -> (i32, i32) {
    %c0_i32 = arith.constant 0 : i32
    %c0_i32_0 = arith.constant 0 : i32
    return %arg0, %c0_i32 : i32, i32
  }
  func.func @transform_1(%arg0: i32) -> (i32, i32) {
    %c0_i32 = arith.constant 0 : i32
    %c0_i32_0 = arith.constant 0 : i32
    %c0_i32_1 = arith.constant 0 : i32
    return %c0_i32, %c0_i32_0 : i32, i32
  }
  func.func @transform_2(%arg0: i32) -> (i32, i32) {
    %c0_i32 = arith.constant 0 : i32
    %c0_i32_0 = arith.constant 0 : i32
    %c0_i32_1 = arith.constant 0 : i32
    return %c0_i32, %c0_i32_0 : i32, i32
  }
  func.func @transform_3(%arg0: i32) -> (i32, i32) {
    %c0_i32 = arith.constant 0 : i32
    %c0_i32_0 = arith.constant 0 : i32
    return %arg0, %c0_i32 : i32, i32
  }
  func.func @transform_4(%arg0: i32) -> (i32, i32) {
    %c0_i32 = arith.constant 0 : i32
    %c0_i32_0 = arith.constant 0 : i32
    return %arg0, %c0_i32 : i32, i32
  }
}

</mosaic_0001>

<llo_original>
// kernel: tpu_custom_call.1
$region0: #{tpu_custom_call.1}
  #allocation0 [shape = 'u32[]', space=smem, size = 0x4, offset = 0x4, fixed_abs, tag = 'smem constant byte address 0x4 - core index']
  #allocation1 [shape = 'u32[72,128]{1,0:T(1,128)}', space=vmem, size = 0x9000, scoped, tag = 'internal scratch']
  %s0 = inlined_call_operand.hbm [shape: f32[128,128], index: 0, kind: input, shape index: {}]
  %s1 = inlined_call_operand.hbm [shape: bf16[128,128], index: 1, kind: input, shape index: {}]
  %s2 = inlined_call_operand.hbm [shape: bf16[128,128], index: 2, kind: input, shape index: {}]
  %s3 = inlined_call_operand.hbm [shape: bf16[128,128], index: 3, kind: output, shape index: {0}]
  %s4 = inlined_call_operand.hbm [shape: f32[128,128], index: 4, kind: output, shape index: {1}]
  %5 = xla_tuple %s3, %s4
  %s6 = sld [smem:[#allocation0]]
  $region42: #{tpu_custom_call.1} parent=0
    _
  %s8 = ssub.s32 1, %s6
  %s9 = scalar_select 0, %s8, %s6
  $region1: #{tpu_custom_call.1} parent=0
    #allocation2 [shape = 'u8[65536]{0}', space=vmem, size = 0x10000, scoped, tag = 'input window, operand 0, single buffered']
    #allocation3 [shape = 's32[1]{0}', space=sflag, size = 0x4, scoped, tag = 'scoped memory for tpu_custom_call.1']
    #allocation4 [shape = 's32[1]{0}', space=sflag, size = 0x4, scoped, tag = 'scoped memory for tpu_custom_call.1']
    #allocation5 [shape = 'u8[32768]{0}', space=vmem, size = 0x8000, scoped, tag = 'input window, operand 1, single buffered']
    #allocation6 [shape = 's32[1]{0}', space=sflag, size = 0x4, scoped, tag = 'scoped memory for tpu_custom_call.1']
    #allocation7 [shape = 'u8[32768]{0}', space=vmem, size = 0x8000, scoped, tag = 'input window, operand 2, single buffered']
    #allocation8 [shape = 'u8[32768]{0}', space=vmem, size = 0x8000, scoped, tag = 'output window, operand 0, single buffered']
    #allocation9 [shape = 'u8[65536]{0}', space=vmem, size = 0x10000, scoped, tag = 'output window, operand 1, single buffered']
    #allocation10 [shape = 's32[1]{0}', space=sflag, size = 0x4, scoped, tag = 'scoped memory for tpu_custom_call.1']
    %10 = vsyncpa [#allocation3], 0
    %11 = vsyncpa [#allocation6], 0
    %12 = vsyncpa [#allocation4], 0
    %13 = vsyncpa [#allocation10], 0
    // Predicated region
    $region2: #{tpu_custom_call.1} parent=1 // pred_check
      _
    $region3: #{tpu_custom_call.1} parent=1 // pred_check_branch
      %15 = sbr.rel (0) target = $region5
    $region4: #{tpu_custom_call.1} parent=1 // pred_region
      %17 = vsyncadd [#allocation3], 0
      %s18 = sshll.u32 %s0, 4
      %s19 = int_to_ptr.hbm [resolvable:$true] %s18
      %s20 = sshll.u32 [#allocation2], 4
      %s21 = int_to_ptr.vmem [resolvable:$true] %s20
      %26 = dma.hbm_to_vmem [thread:$0]  %s19, 2048, %s21, [#allocation3], 128, 128, 8
    $region5: #{tpu_custom_call.1} parent=1 // pred_fallthru
      _
    // Predicated region
    $region6: #{tpu_custom_call.1} parent=1 // pred_check
      _
    $region7: #{tpu_custom_call.1} parent=1 // pred_check_branch
      %28 = sbr.rel (0) target = $region9
    $region8: #{tpu_custom_call.1} parent=1 // pred_region
      %30 = vsyncadd [#allocation6], 0
      %s31 = sshll.u32 %s1, 4
      %s32 = int_to_ptr.hbm [resolvable:$true] %s31
      %s33 = sshll.u32 [#allocation5], 4
      %s34 = int_to_ptr.vmem [resolvable:$true] %s33
      %39 = dma.hbm_to_vmem [thread:$0]  %s32, 1024, %s34, [#allocation6], 64, 64, 4
    $region9: #{tpu_custom_call.1} parent=1 // pred_fallthru
      _
    // Predicated region
    $region10: #{tpu_custom_call.1} parent=1 // pred_check
      _
    $region11: #{tpu_custom_call.1} parent=1 // pred_check_branch
      %41 = sbr.rel (0) target = $region13
    $region12: #{tpu_custom_call.1} parent=1 // pred_region
      %43 = vsyncadd [#allocation6], 0
      %s44 = sshll.u32 %s2, 4
      %s45 = int_to_ptr.hbm [resolvable:$true] %s44
      %s46 = sshll.u32 [#allocation7], 4
      %s47 = int_to_ptr.vmem [resolvable:$true] %s46
      %52 = dma.hbm_to_vmem [thread:$0]  %s45, 1024, %s47, [#allocation6], 64, 64, 4
    $region13: #{tpu_custom_call.1} parent=1 // pred_fallthru
      _
    // Predicated region
    $region14: #{tpu_custom_call.1} parent=1 // pred_check
      _
    $region15: #{tpu_custom_call.1} parent=1 // pred_check_branch
      %54 = sbr.rel (0) target = $region17
    $region16: #{tpu_custom_call.1} parent=1 // pred_region
      %56 = dma.done [#allocation3], 2048
    $region17: #{tpu_custom_call.1} parent=1 // pred_fallthru
      _
    // Predicated region
    $region18: #{tpu_custom_call.1} parent=1 // pred_check
      _
    $region19: #{tpu_custom_call.1} parent=1 // pred_check_branch
      %58 = sbr.rel (0) target = $region21
    $region20: #{tpu_custom_call.1} parent=1 // pred_region
      %60 = dma.done [#allocation6], 1024
    $region21: #{tpu_custom_call.1} parent=1 // pred_fallthru
      _
    // Predicated region
    $region22: #{tpu_custom_call.1} parent=1 // pred_check
      _
    $region23: #{tpu_custom_call.1} parent=1 // pred_check_branch
      %62 = sbr.rel (0) target = $region25
    $region24: #{tpu_custom_call.1} parent=1 // pred_region
      %64 = dma.done [#allocation6], 1024
    $region25: #{tpu_custom_call.1} parent=1 // pred_fallthru
      _
    %v65 = vld [vmem:[#allocation2] sm:$0xff]
    %v66 = vld [vmem:[#allocation2 + $0x8] sm:$0xff]
    %v67 = vld [vmem:[#allocation2 + $0x10] sm:$0xff]
    %v68 = vld [vmem:[#allocation2 + $0x18] sm:$0xff]
    %v69 = vld [vmem:[#allocation2 + $0x20] sm:$0xff]
    %v70 = vld [vmem:[#allocation2 + $0x28] sm:$0xff]
    %v71 = vld [vmem:[#allocation2 + $0x30] sm:$0xff]
    %v72 = vld [vmem:[#allocation2 + $0x38] sm:$0xff]
    %v73 = vld [vmem:[#allocation2 + $0x40] sm:$0xff]
    %v74 = vld [vmem:[#allocation2 + $0x48] sm:$0xff]
    %v75 = vld [vmem:[#allocation2 + $0x50] sm:$0xff]
    %v76 = vld [vmem:[#allocation2 + $0x58] sm:$0xff]
    %v77 = vld [vmem:[#allocation2 + $0x60] sm:$0xff]
    %v78 = vld [vmem:[#allocation2 + $0x68] sm:$0xff]
    %v79 = vld [vmem:[#allocation2 + $0x70] sm:$0xff]
    %v80 = vld [vmem:[#allocation2 + $0x78] sm:$0xff]
    %v81 = vpack.c.bf16 %v66, %v65
    %v82 = vpack.c.bf16 %v68, %v67
    %v83 = vpack.c.bf16 %v70, %v69
    %v84 = vpack.c.bf16 %v72, %v71
    %v85 = vpack.c.bf16 %v74, %v73
    %v86 = vpack.c.bf16 %v76, %v75
    %v87 = vpack.c.bf16 %v78, %v77
    %v88 = vpack.c.bf16 %v80, %v79
    %v89 = vld [vmem:[#allocation5] sm:$0xf]
    %v90 = vld [vmem:[#allocation5 + $0x4] sm:$0xf]
    %v91 = vld [vmem:[#allocation5 + $0x8] sm:$0xf]
    %v92 = vld [vmem:[#allocation5 + $0xc] sm:$0xf]
    %v93 = vld [vmem:[#allocation5 + $0x10] sm:$0xf]
    %v94 = vld [vmem:[#allocation5 + $0x14] sm:$0xf]
    %v95 = vld [vmem:[#allocation5 + $0x18] sm:$0xf]
    %v96 = vld [vmem:[#allocation5 + $0x1c] sm:$0xf]
    %v97 = vld [vmem:[#allocation5 + $0x20] sm:$0xf]
    %v98 = vld [vmem:[#allocation5 + $0x24] sm:$0xf]
    %v99 = vld [vmem:[#allocation5 + $0x28] sm:$0xf]
    %v100 = vld [vmem:[#allocation5 + $0x2c] sm:$0xf]
    %v101 = vld [vmem:[#allocation5 + $0x30] sm:$0xf]
    %v102 = vld [vmem:[#allocation5 + $0x34] sm:$0xf]
    %v103 = vld [vmem:[#allocation5 + $0x38] sm:$0xf]
    %v104 = vld [vmem:[#allocation5 + $0x3c] sm:$0xf]
    %v121 = vunpack.c.l.b16 %v89
    %v122 = vunpack.c.l.b16 %v90
    %v123 = vunpack.c.l.b16 %v91
    %v124 = vunpack.c.l.b16 %v92
    %v125 = vunpack.c.l.b16 %v93
    %v126 = vunpack.c.l.b16 %v94
    %v127 = vunpack.c.l.b16 %v95
    %v128 = vunpack.c.l.b16 %v96
    %v129 = vunpack.c.l.b16 %v97
    %v130 = vunpack.c.l.b16 %v98
    %v131 = vunpack.c.l.b16 %v99
    %v132 = vunpack.c.l.b16 %v100
    %v133 = vunpack.c.l.b16 %v101
    %v134 = vunpack.c.l.b16 %v102
    %v135 = vunpack.c.l.b16 %v103
    %v136 = vunpack.c.l.b16 %v104
    %v137 = vpack.c.b16 %v122, %v121
    %v138 = vpack.c.b16 %v124, %v123
    %v139 = vpack.c.b16 %v126, %v125
    %v140 = vpack.c.b16 %v128, %v127
    %v141 = vpack.c.b16 %v130, %v129
    %v142 = vpack.c.b16 %v132, %v131
    %v143 = vpack.c.b16 %v134, %v133
    %v144 = vpack.c.b16 %v136, %v135
    %153 = vmatpush.bf16.msra.mxu0 %v144
    %154 = vmatpush.bf16.msra.mxu0 %v143
    %155 = vmatpush.bf16.msra.mxu0 %v142
    %156 = vmatpush.bf16.msra.mxu0 %v141
    %157 = vmatpush.bf16.msra.mxu0 %v140
    %158 = vmatpush.bf16.msra.mxu0 %v139
    %159 = vmatpush.bf16.msra.mxu0 %v138
    %160 = vmatpush.bf16.msra.mxu0 %v137
    %161 = vmatmul.bf16.gmra.mxu0 %v81
    %v162 = vpop.f32.mrf.mxu0
    %v163 = vadd.f32 0.0, %v162
    %v164 = vpop.f32.mrf.mxu0
    %v165 = vadd.f32 0.0, %v164
    %166 = vmatmul.bf16.gmra.mxu0 %v82
    %v167 = vpop.f32.mrf.mxu0
    %v168 = vadd.f32 0.0, %v167
    %v169 = vpop.f32.mrf.mxu0
    %v170 = vadd.f32 0.0, %v169
    %171 = vmatmul.bf16.gmra.mxu0 %v83
    %v172 = vpop.f32.mrf.mxu0
    %v173 = vadd.f32 0.0, %v172
    %v174 = vpop.f32.mrf.mxu0
    %v175 = vadd.f32 0.0, %v174
    %176 = vmatmul.bf16.gmra.mxu0 %v84
    %v177 = vpop.f32.mrf.mxu0
    %v178 = vadd.f32 0.0, %v177
    %v179 = vpop.f32.mrf.mxu0
    %v180 = vadd.f32 0.0, %v179
    %181 = vmatmul.bf16.gmra.mxu0 %v85
    %v182 = vpop.f32.mrf.mxu0
    %v183 = vadd.f32 0.0, %v182
    %v184 = vpop.f32.mrf.mxu0
    %v185 = vadd.f32 0.0, %v184
    %186 = vmatmul.bf16.gmra.mxu0 %v86
    %v187 = vpop.f32.mrf.mxu0
    %v188 = vadd.f32 0.0, %v187
    %v189 = vpop.f32.mrf.mxu0
    %v190 = vadd.f32 0.0, %v189
    %191 = vmatmul.bf16.gmra.mxu0 %v87
    %v192 = vpop.f32.mrf.mxu0
    %v193 = vadd.f32 0.0, %v192
    %v194 = vpop.f32.mrf.mxu0
    %v195 = vadd.f32 0.0, %v194
    %196 = vmatmul.bf16.gmra.mxu0 %v88
    %v197 = vpop.f32.mrf.mxu0
    %v198 = vadd.f32 0.0, %v197
    %v199 = vpop.f32.mrf.mxu0
    %v200 = vadd.f32 0.0, %v199
    %201 = vdwg.mxu0
    %v202 = vpack.c.bf16 %v163, %v163
    %v203 = vpack.c.bf16 %v165, %v165
    %v204 = vpack.c.bf16 %v168, %v168
    %v205 = vpack.c.bf16 %v170, %v170
    %v206 = vpack.c.bf16 %v173, %v173
    %v207 = vpack.c.bf16 %v175, %v175
    %v208 = vpack.c.bf16 %v178, %v178
    %v209 = vpack.c.bf16 %v180, %v180
    %v210 = vpack.c.bf16 %v183, %v183
    %v211 = vpack.c.bf16 %v185, %v185
    %v212 = vpack.c.bf16 %v188, %v188
    %v213 = vpack.c.bf16 %v190, %v190
    %v214 = vpack.c.bf16 %v193, %v193
    %v215 = vpack.c.bf16 %v195, %v195
    %v216 = vpack.c.bf16 %v198, %v198
    %v217 = vpack.c.bf16 %v200, %v200
    %218 = vst [vmem:[#allocation8] sm:$0xf] %v202
    %219 = vst [vmem:[#allocation8 + $0x4] sm:$0xf] %v203
    %220 = vst [vmem:[#allocation8 + $0x8] sm:$0xf] %v204
    %221 = vst [vmem:[#allocation8 + $0xc] sm:$0xf] %v205
    %222 = vst [vmem:[#allocation8 + $0x10] sm:$0xf] %v206
    %223 = vst [vmem:[#allocation8 + $0x14] sm:$0xf] %v207
    %224 = vst [vmem:[#allocation8 + $0x18] sm:$0xf] %v208
    %225 = vst [vmem:[#allocation8 + $0x1c] sm:$0xf] %v209
    %226 = vst [vmem:[#allocation8 + $0x20] sm:$0xf] %v210
    %227 = vst [vmem:[#allocation8 + $0x24] sm:$0xf] %v211
    %228 = vst [vmem:[#allocation8 + $0x28] sm:$0xf] %v212
    %229 = vst [vmem:[#allocation8 + $0x2c] sm:$0xf] %v213
    %230 = vst [vmem:[#allocation8 + $0x30] sm:$0xf] %v214
    %231 = vst [vmem:[#allocation8 + $0x34] sm:$0xf] %v215
    %232 = vst [vmem:[#allocation8 + $0x38] sm:$0xf] %v216
    %233 = vst [vmem:[#allocation8 + $0x3c] sm:$0xf] %v217
    %v234 = vld [vmem:[#allocation7] sm:$0xf]
    %v235 = vld [vmem:[#allocation7 + $0x4] sm:$0xf]
    %v236 = vld [vmem:[#allocation7 + $0x8] sm:$0xf]
    %v237 = vld [vmem:[#allocation7 + $0xc] sm:$0xf]
    %v238 = vld [vmem:[#allocation7 + $0x10] sm:$0xf]
    %v239 = vld [vmem:[#allocation7 + $0x14] sm:$0xf]
    %v240 = vld [vmem:[#allocation7 + $0x18] sm:$0xf]
    %v241 = vld [vmem:[#allocation7 + $0x1c] sm:$0xf]
    %v242 = vld [vmem:[#allocation7 + $0x20] sm:$0xf]
    %v243 = vld [vmem:[#allocation7 + $0x24] sm:$0xf]
    %v244 = vld [vmem:[#allocation7 + $0x28] sm:$0xf]
    %v245 = vld [vmem:[#allocation7 + $0x2c] sm:$0xf]
    %v246 = vld [vmem:[#allocation7 + $0x30] sm:$0xf]
    %v247 = vld [vmem:[#allocation7 + $0x34] sm:$0xf]
    %v248 = vld [vmem:[#allocation7 + $0x38] sm:$0xf]
    %v249 = vld [vmem:[#allocation7 + $0x3c] sm:$0xf]
    %v266 = vunpack.c.l.b16 %v202
    %v267 = vunpack.c.l.b16 %v203
    %v268 = vunpack.c.l.b16 %v204
    %v269 = vunpack.c.l.b16 %v205
    %v270 = vunpack.c.l.b16 %v206
    %v271 = vunpack.c.l.b16 %v207
    %v272 = vunpack.c.l.b16 %v208
    %v273 = vunpack.c.l.b16 %v209
    %v274 = vunpack.c.l.b16 %v210
    %v275 = vunpack.c.l.b16 %v211
    %v276 = vunpack.c.l.b16 %v212
    %v277 = vunpack.c.l.b16 %v213
    %v278 = vunpack.c.l.b16 %v214
    %v279 = vunpack.c.l.b16 %v215
    %v280 = vunpack.c.l.b16 %v216
    %v281 = vunpack.c.l.b16 %v217
    %v282 = vpack.c.b16 %v267, %v266
    %v283 = vpack.c.b16 %v269, %v268
    %v284 = vpack.c.b16 %v271, %v270
    %v285 = vpack.c.b16 %v273, %v272
    %v286 = vpack.c.b16 %v275, %v274
    %v287 = vpack.c.b16 %v277, %v276
    %v288 = vpack.c.b16 %v279, %v278
    %v289 = vpack.c.b16 %v281, %v280
    %v314 = vunpack.c.l.b16 %v234
    %v315 = vunpack.c.l.b16 %v235
    %v316 = vunpack.c.l.b16 %v236
    %v317 = vunpack.c.l.b16 %v237
    %v318 = vunpack.c.l.b16 %v238
    %v319 = vunpack.c.l.b16 %v239
    %v320 = vunpack.c.l.b16 %v240
    %v321 = vunpack.c.l.b16 %v241
    %v322 = vunpack.c.l.b16 %v242
    %v323 = vunpack.c.l.b16 %v243
    %v324 = vunpack.c.l.b16 %v244
    %v325 = vunpack.c.l.b16 %v245
    %v326 = vunpack.c.l.b16 %v246
    %v327 = vunpack.c.l.b16 %v247
    %v328 = vunpack.c.l.b16 %v248
    %v329 = vunpack.c.l.b16 %v249
    %v330 = vpack.c.b16 %v315, %v314
    %v331 = vpack.c.b16 %v317, %v316
    %v332 = vpack.c.b16 %v319, %v318
    %v333 = vpack.c.b16 %v321, %v320
    %v334 = vpack.c.b16 %v323, %v322
    %v335 = vpack.c.b16 %v325, %v324
    %v336 = vpack.c.b16 %v327, %v326
    %v337 = vpack.c.b16 %v329, %v328
    %346 = vmatpush.bf16.msra.mxu0 %v337
    %347 = vmatpush.bf16.msra.mxu0 %v336
    %348 = vmatpush.bf16.msra.mxu0 %v335
    %349 = vmatpush.bf16.msra.mxu0 %v334
    %350 = vmatpush.bf16.msra.mxu0 %v333
    %351 = vmatpush.bf16.msra.mxu0 %v332
    %352 = vmatpush.bf16.msra.mxu0 %v331
    %353 = vmatpush.bf16.msra.mxu0 %v330
    %354 = vmatmul.bf16.gmra.mxu0 %v282
    %v355 = vpop.f32.mrf.mxu0
    %v356 = vadd.f32 0.0, %v355
    %v357 = vpop.f32.mrf.mxu0
    %v358 = vadd.f32 0.0, %v357
    %359 = vmatmul.bf16.gmra.mxu0 %v283
    %v360 = vpop.f32.mrf.mxu0
    %v361 = vadd.f32 0.0, %v360
    %v362 = vpop.f32.mrf.mxu0
    %v363 = vadd.f32 0.0, %v362
    %364 = vmatmul.bf16.gmra.mxu0 %v284
    %v365 = vpop.f32.mrf.mxu0
    %v366 = vadd.f32 0.0, %v365
    %v367 = vpop.f32.mrf.mxu0
    %v368 = vadd.f32 0.0, %v367
    %369 = vmatmul.bf16.gmra.mxu0 %v285
    %v370 = vpop.f32.mrf.mxu0
    %v371 = vadd.f32 0.0, %v370
    %v372 = vpop.f32.mrf.mxu0
    %v373 = vadd.f32 0.0, %v372
    %374 = vmatmul.bf16.gmra.mxu0 %v286
    %v375 = vpop.f32.mrf.mxu0
    %v376 = vadd.f32 0.0, %v375
    %v377 = vpop.f32.mrf.mxu0
    %v378 = vadd.f32 0.0, %v377
    %379 = vmatmul.bf16.gmra.mxu0 %v287
    %v380 = vpop.f32.mrf.mxu0
    %v381 = vadd.f32 0.0, %v380
    %v382 = vpop.f32.mrf.mxu0
    %v383 = vadd.f32 0.0, %v382
    %384 = vmatmul.bf16.gmra.mxu0 %v288
    %v385 = vpop.f32.mrf.mxu0
    %v386 = vadd.f32 0.0, %v385
    %v387 = vpop.f32.mrf.mxu0
    %v388 = vadd.f32 0.0, %v387
    %389 = vmatmul.bf16.gmra.mxu0 %v289
    %v390 = vpop.f32.mrf.mxu0
    %v391 = vadd.f32 0.0, %v390
    %v392 = vpop.f32.mrf.mxu0
    %v393 = vadd.f32 0.0, %v392
    %394 = vdwg.mxu0
    %395 = vst [vmem:[#allocation9] sm:$0xff] %v356
    %396 = vst [vmem:[#allocation9 + $0x8] sm:$0xff] %v358
    %397 = vst [vmem:[#allocation9 + $0x10] sm:$0xff] %v361
    %398 = vst [vmem:[#allocation9 + $0x18] sm:$0xff] %v363
    %399 = vst [vmem:[#allocation9 + $0x20] sm:$0xff] %v366
    %400 = vst [vmem:[#allocation9 + $0x28] sm:$0xff] %v368
    %401 = vst [vmem:[#allocation9 + $0x30] sm:$0xff] %v371
    %402 = vst [vmem:[#allocation9 + $0x38] sm:$0xff] %v373
    %403 = vst [vmem:[#allocation9 + $0x40] sm:$0xff] %v376
    %404 = vst [vmem:[#allocation9 + $0x48] sm:$0xff] %v378
    %405 = vst [vmem:[#allocation9 + $0x50] sm:$0xff] %v381
    %406 = vst [vmem:[#allocation9 + $0x58] sm:$0xff] %v383
    %407 = vst [vmem:[#allocation9 + $0x60] sm:$0xff] %v386
    %408 = vst [vmem:[#allocation9 + $0x68] sm:$0xff] %v388
    %409 = vst [vmem:[#allocation9 + $0x70] sm:$0xff] %v391
    %410 = vst [vmem:[#allocation9 + $0x78] sm:$0xff] %v393
    // Predicated region
    $region26: #{tpu_custom_call.1} parent=1 // pred_check
      _
    $region27: #{tpu_custom_call.1} parent=1 // pred_check_branch
      %412 = sbr.rel (0) target = $region29
    $region28: #{tpu_custom_call.1} parent=1 // pred_region
      %414 = vsyncadd [#allocation4], 0
      %s415 = sshll.u32 [#allocation8], 4
      %s416 = int_to_ptr.vmem [resolvable:$true] %s415
      %s417 = sshll.u32 %s3, 4
      %s418 = int_to_ptr.hbm [resolvable:$true] %s417
      %423 = dma.vmem_to_hbm [thread:$0]  %s416, 1024, %s418, [#allocation4], 64, 64, 4
    $region29: #{tpu_custom_call.1} parent=1 // pred_fallthru
      _
    // Predicated region
    $region30: #{tpu_custom_call.1} parent=1 // pred_check
      _
    $region31: #{tpu_custom_call.1} parent=1 // pred_check_branch
      %425 = sbr.rel (0) target = $region33
    $region32: #{tpu_custom_call.1} parent=1 // pred_region
      %427 = vsyncadd [#allocation10], 0
      %s428 = sshll.u32 [#allocation9], 4
      %s429 = int_to_ptr.vmem [resolvable:$true] %s428
      %s430 = sshll.u32 %s4, 4
      %s431 = int_to_ptr.hbm [resolvable:$true] %s430
      %436 = dma.vmem_to_hbm [thread:$0]  %s429, 2048, %s431, [#allocation10], 128, 128, 8
    $region33: #{tpu_custom_call.1} parent=1 // pred_fallthru
      _
    // Predicated region
    $region34: #{tpu_custom_call.1} parent=1 // pred_check
      _
    $region35: #{tpu_custom_call.1} parent=1 // pred_check_branch
      %438 = sbr.rel (0) target = $region37
    $region36: #{tpu_custom_call.1} parent=1 // pred_region
      %440 = dma.done [#allocation4], 1024
    $region37: #{tpu_custom_call.1} parent=1 // pred_fallthru
      _
    // Predicated region
    $region38: #{tpu_custom_call.1} parent=1 // pred_check
      _
    $region39: #{tpu_custom_call.1} parent=1 // pred_check_branch
      %442 = sbr.rel (0) target = $region41
    $region40: #{tpu_custom_call.1} parent=1 // pred_region
      %444 = dma.done [#allocation10], 2048
    $region41: #{tpu_custom_call.1} parent=1 // pred_fallthru
      _
    %445 = vsyncpa [#allocation3], 1
    %446 = vsyncpa [#allocation6], 1
    %447 = vsyncpa [#allocation4], 1
    %448 = vsyncpa [#allocation10], 1

</llo_original>
